<compile_context>
chip_gen: v5e
topology: v5e:2x2
jax: 0.10.0
libtpu: 0.0.40
codegen_flags: <defaults>
</compile_context>

<pallas_src>
import functools

import numpy as np

import jax
import jax.numpy as jnp
from jax import lax
from jax.experimental import pallas as pl
from jax.experimental.pallas import tpu as pltpu

N_IN, N_H1, N_H2, N_OUT = 2, 9, 5, 1
LANES = 128


# ----------------------------------------------------------------------------
# Device heuristics
# ----------------------------------------------------------------------------
def _device_kind():
    try:
        return jax.devices()[0].device_kind.lower()
    except Exception:
        return ""


def _auto_compute_dtype():
    # bf16 VALU exists on v6e / v7x (each packed op covers 2048 elems instead
    # of 1024 and input/output DMA halves).  v5e and older have no bf16 VALU,
    # so bf16 would add convert ops on the saturated VALU slot -> stay f32.
    kind = _device_kind()
    if ("v6" in kind) or ("v7" in kind) or ("tpu7" in kind.replace(" ", "")):
        return jnp.bfloat16
    return jnp.float32


def _num_tensorcores():
    # v7x has 2 TensorCores per chip; the "parallel" grid axis is sharded
    # across them, so we want an even number (>= 2) of grid steps there.
    kind = _device_kind()
    return 2 if (("v7" in kind) or ("tpu7" in kind.replace(" ", ""))) else 1


def _round_up(a, m):
    return -(-a // m) * m


# ----------------------------------------------------------------------------
# Kernel bodies
# ----------------------------------------------------------------------------
def _mlp_chunked(x_ref, o_ref, W1, B1, W2, B2, W3, B3, *, chunk):
    """Shared compute: row-chunked, fully-unrolled-per-chunk VPU MLP.

    W*/B* are nested lists of multiplicands/addends: either rank-0 f32 scalars
    (SMEM path) or (chunk, LANES) compute-dtype arrays (VMEM splat path); both
    broadcast cleanly against the (chunk, LANES) activation slabs.
    The fori_loop (a real scf.for, not a static unroll) bounds live vreg
    ranges so the 2+9+5 activation planes never spill.
    """
    n_chunks = x_ref.shape[1] // chunk

    def body(c, carry):
        r0 = pl.multiple_of(c * chunk, chunk)
        x = [x_ref[i, pl.ds(r0, chunk), :] for i in range(N_IN)]

        # Layer 1 + ReLU (unrolled FMAs).
        h1 = []
        for j in range(N_H1):
            acc = x[0] * W1[0][j]
            for i in range(1, N_IN):
                acc = acc + x[i] * W1[i][j]
            h1.append(jnp.maximum(acc + B1[j], 0))

        # Layer 2 + ReLU.
        h2 = []
        for j in range(N_H2):
            acc = h1[0] * W2[0][j]
            for i in range(1, N_H1):
                acc = acc + h1[i] * W2[i][j]
            h2.append(jnp.maximum(acc + B2[j], 0))

        # Layer 3 (no activation), single output feature.
        out = h2[0] * W3[0][0]
        for i in range(1, N_H2):
            out = out + h2[i] * W3[i][0]
        out = out + B3[0]

        # Lane-dense store of the whole (chunk, 128) slab.
        o_ref[pl.ds(r0, chunk), :] = out.astype(o_ref.dtype)
        return carry

    lax.fori_loop(0, n_chunks, body, 0)


def _kernel_smem_scalar_weights(w1_ref, b1_ref, w2_ref, b2_ref, w3_ref, b3_ref,
                                x_ref, o_ref, *, chunk):
    # f32 path (v5e & default): tiny weights live in SMEM and drive
    # vector x scalar FMAs (no vreg or load-slot cost for the weights).
    W1 = [[w1_ref[i, j] for j in range(N_H1)] for i in range(N_IN)]
    B1 = [b1_ref[j] for j in range(N_H1)]
    W2 = [[w2_ref[i, j] for j in range(N_H2)] for i in range(N_H1)]
    B2 = [b2_ref[j] for j in range(N_H2)]
    W3 = [[w3_ref[i, j] for j in range(N_OUT)] for i in range(N_H2)]
    B3 = [b3_ref[j] for j in range(N_OUT)]
    _mlp_chunked(x_ref, o_ref, W1, B1, W2, B2, W3, B3, chunk=chunk)


def _kernel_vmem_row_weights(w1_ref, b1_ref, w2_ref, b2_ref, w3_ref, b3_ref,
                             x_ref, o_ref, *, chunk):
    # bf16 path (v6e / v7x): weights are pre-splatted across the 128 lanes in
    # the wrapper and arrive as (n, LANES) compute-dtype VMEM arrays, so every
    # layer op is a pure bf16 vector op with no scalar-dtype conversions.
    # The (chunk, LANES) broadcasts are hoisted once per grid step.
    def rows(ref, n):
        return [jnp.broadcast_to(ref[r], (chunk, LANES)) for r in range(n)]

    w1 = rows(w1_ref, N_IN * N_H1)
    B1 = rows(b1_ref, N_H1)
    w2 = rows(w2_ref, N_H1 * N_H2)
    B2 = rows(b2_ref, N_H2)
    w3 = rows(w3_ref, N_H2 * N_OUT)
    B3 = rows(b3_ref, N_OUT)
    W1 = [[w1[i * N_H1 + j] for j in range(N_H1)] for i in range(N_IN)]
    W2 = [[w2[i * N_H2 + j] for j in range(N_H2)] for i in range(N_H1)]
    W3 = [[w3[i * N_OUT + j] for j in range(N_OUT)] for i in range(N_H2)]
    _mlp_chunked(x_ref, o_ref, W1, B1, W2, B2, W3, B3, chunk=chunk)


# ----------------------------------------------------------------------------
# Wrapper
# ----------------------------------------------------------------------------
def mlp_forward(x, params, *, tile_rows=2048, row_chunk=16,
                compute_dtype=None, out_dtype=jnp.float32):
    """x: (B, 2) float32 (PyTorch layout).  Returns (B, 1) in `out_dtype`."""
    w1, b1, w2, b2, w3, b3 = params
    B = x.shape[0]
    assert x.shape[1] == N_IN

    cdt = np.dtype(_auto_compute_dtype() if compute_dtype is None else compute_dtype)

    # --- grid / tile selection -------------------------------------------
    # (a) big tiles amortize the ~0.35us per-grid-step overhead,
    # (b) on multi-TensorCore parts keep an even number >= 2 of steps so the
    #     "parallel" axis actually feeds both cores,
    # (c) tile must be a multiple of row_chunk for the in-kernel strip-mining.
    n_rows = pl.cdiv(B, LANES)
    max_tile = max(row_chunk, (tile_rows // row_chunk) * row_chunk)
    grid_steps = pl.cdiv(n_rows, max_tile)
    num_tc = _num_tensorcores()
    if num_tc > 1 and n_rows >= num_tc * row_chunk:
        grid_steps = _round_up(max(grid_steps, num_tc), num_tc)
    tile = _round_up(pl.cdiv(n_rows, grid_steps), row_chunk)
    grid_steps = pl.cdiv(n_rows, tile)
    n_rows_pad = grid_steps * tile
    b_pad = n_rows_pad * LANES

    # --- pack batch onto lanes -------------------------------------------
    # (B, 2) -> (2, n_rows_pad, 128) dense feature planes; the cast to the
    # compute dtype is fused into the same pass.  This transpose+pad is one
    # extra HBM pass; hot paths should keep activations in this packed layout
    # and feed the pallas_call below directly.
    xt = jnp.zeros((N_IN, b_pad), cdt).at[:, :B].set(x.T.astype(cdt))
    xt = xt.reshape(N_IN, n_rows_pad, LANES)

    # --- cost estimate (lets XLA schedule the pack/unpack around the call) --
    flops_per_elem = (2 * (N_IN * N_H1 + N_H1 * N_H2 + N_H2 * N_OUT)
                      + 2 * (N_H1 + N_H2 + N_OUT))
    cost = pl.CostEstimate(
        flops=flops_per_elem * b_pad,
        transcendentals=0,
        bytes_accessed=(N_IN + 1) * cdt.itemsize * b_pad,
    )

    x_spec = pl.BlockSpec((N_IN, tile, LANES), lambda i: (0, i, 0))
    o_spec = pl.BlockSpec((tile, LANES), lambda i: (i, 0))

    if cdt == np.dtype(jnp.float32):
        # f32: weights as SMEM scalars (vector-scalar FMAs).
        kernel = functools.partial(_kernel_smem_scalar_weights, chunk=row_chunk)
        smem = pl.BlockSpec(memory_space=pltpu.MemorySpace.SMEM)
        w_in_specs = [smem] * 6
        w_args = (w1.astype(jnp.float32), b1.astype(jnp.float32),
                  w2.astype(jnp.float32), b2.astype(jnp.float32),
                  w3.astype(jnp.float32), b3.astype(jnp.float32))
    else:
        # bf16: weights as lane-splatted (n, 128) rows in VMEM, compute dtype.
        kernel = functools.partial(_kernel_vmem_row_weights, chunk=row_chunk)

        def splat(a):
            flat = a.reshape(-1, 1).astype(cdt)
            return jnp.broadcast_to(flat, (flat.shape[0], LANES))

        w_args = (splat(w1), splat(b1), splat(w2), splat(b2), splat(w3), splat(b3))
        w_in_specs = [pl.BlockSpec((a.shape[0], LANES), lambda i: (0, 0))
                      for a in w_args]

    out = pl.pallas_call(
        kernel,
        out_shape=jax.ShapeDtypeStruct((n_rows_pad, LANES), cdt),
        grid=(grid_steps,),
        in_specs=w_in_specs + [x_spec],
        out_specs=o_spec,
        compiler_params=pltpu.CompilerParams(
            dimension_semantics=("parallel",),  # batch axis -> both TCs (v7x)
        ),
        cost_estimate=cost,
    )(*w_args, xt)

    # Back to PyTorch-style (B, 1).  The un-pad slice is skipped when B is
    # already lane-aligned (padded region holds bias-propagated garbage).
    flat = out.reshape(-1)
    if b_pad != B:
        flat = flat[:B]
    return flat.reshape(B, 1).astype(out_dtype)


# ----------------------------------------------------------------------------
# Reference / params
# ----------------------------------------------------------------------------
def init_params(key):
    # PyTorch stores Linear weight as (out, in); we store (in, out) and compute
    # x @ W, which is the same function.  Biases are 1-D.
    k1, k2, k3, k4, k5, k6 = jax.random.split(key, 6)
    w1 = jax.random.normal(k1, (N_IN, N_H1), jnp.float32) * 0.5
    b1 = jax.random.normal(k2, (N_H1,), jnp.float32) * 0.1
    w2 = jax.random.normal(k3, (N_H1, N_H2), jnp.float32) * 0.5
    b2 = jax.random.normal(k4, (N_H2,), jnp.float32) * 0.1
    w3 = jax.random.normal(k5, (N_H2, N_OUT), jnp.float32) * 0.5
    b3 = jax.random.normal(k6, (N_OUT,), jnp.float32) * 0.1
    return (w1, b1, w2, b2, w3, b3)


def mlp_reference(x, params):
    w1, b1, w2, b2, w3, b3 = params
    h1 = jnp.maximum(x @ w1 + b1, 0.0)
    h2 = jnp.maximum(h1 @ w2 + b2, 0.0)
    return h2 @ w3 + b3


if __name__ == "__main__":
    key = jax.random.PRNGKey(0)
    kx, kx2, kp = jax.random.split(key, 3)
    params = init_params(kp)

    cdt = np.dtype(_auto_compute_dtype())
    # bf16 on v6e/v7x: loosen tolerance (the exact-f32 check below stays tight).
    tol = 1e-5 if cdt == np.dtype(jnp.float32) else 1e-1

    fwd = jax.jit(
        mlp_forward,
        static_argnames=("tile_rows", "row_chunk", "compute_dtype", "out_dtype"),
    )

    # Small primary check (matches the toy module's intended usage).
    batch = 8
    x = jax.random.normal(kx, (batch, N_IN), jnp.float32)
    out = jax.block_until_ready(fwd(x, params))
    ref = mlp_reference(x, params)
    assert out.shape == (batch, 1)
    assert jnp.allclose(out, ref, atol=tol, rtol=tol)

    # Second check exercising the lane-padding tail path (B not mult. of 128).
    batch2 = 300
    x2 = jax.random.normal(kx2, (batch2, N_IN), jnp.float32)
    out2 = jax.block_until_ready(fwd(x2, params))
    ref2 = mlp_reference(x2, params)
    assert out2.shape == (batch2, 1)
    assert jnp.allclose(out2, ref2, atol=tol, rtol=tol)

    # Exact-semantics check on the forced-f32 path regardless of device.
    out3 = jax.block_until_ready(mlp_forward(x2, params, compute_dtype=jnp.float32))
    assert out3.shape == (batch2, 1)
    assert jnp.allclose(out3, ref2, atol=1e-5, rtol=1e-5)

    print("KERNEL_OK")
</pallas_src>

<mosaic_0001>
module attributes {stable_mosaic.version = 11 : i64} {
  func.func @_kernel_smem_scalar_weights(%arg0: i32, %arg1: memref<2x9xf32, #tpu.memory_space<smem>>, %arg2: memref<9xf32, #tpu.memory_space<smem>>, %arg3: memref<9x5xf32, #tpu.memory_space<smem>>, %arg4: memref<5xf32, #tpu.memory_space<smem>>, %arg5: memref<5x1xf32, #tpu.memory_space<smem>>, %arg6: memref<1xf32, #tpu.memory_space<smem>>, %arg7: memref<2x16x128xf32, #tpu.memory_space<vmem>>, %arg8: memref<16x128xf32, #tpu.memory_space<vmem>>) attributes {dimension_semantics = [#tpu.dimension_semantics<parallel>], iteration_bounds = array<i64: 1>, scalar_prefetch = 0 : i64, scratch_operands = 0 : i64, tpu.core_type = #tpu.core_type<tc>, window_params = [{transform_indices = @transform_0, window_bounds = array<i64: 2, 9>}, {transform_indices = @transform_1, window_bounds = array<i64: 9>}, {transform_indices = @transform_2, window_bounds = array<i64: 9, 5>}, {transform_indices = @transform_3, window_bounds = array<i64: 5>}, {transform_indices = @transform_4, window_bounds = array<i64: 5, 1>}, {transform_indices = @transform_5, window_bounds = array<i64: 1>}, {transform_indices = @transform_6, window_bounds = array<i64: 2, 16, 128>}, {transform_indices = @transform_7, window_bounds = array<i64: 16, 128>}]} {
    %c0 = arith.constant 0 : index
    %c0_0 = arith.constant 0 : index
    %0 = memref.load %arg1[%c0, %c0_0] : memref<2x9xf32, #tpu.memory_space<smem>>
    %c0_1 = arith.constant 0 : index
    %c1 = arith.constant 1 : index
    %1 = memref.load %arg1[%c0_1, %c1] : memref<2x9xf32, #tpu.memory_space<smem>>
    %c0_2 = arith.constant 0 : index
    %c2 = arith.constant 2 : index
    %2 = memref.load %arg1[%c0_2, %c2] : memref<2x9xf32, #tpu.memory_space<smem>>
    %c0_3 = arith.constant 0 : index
    %c3 = arith.constant 3 : index
    %3 = memref.load %arg1[%c0_3, %c3] : memref<2x9xf32, #tpu.memory_space<smem>>
    %c0_4 = arith.constant 0 : index
    %c4 = arith.constant 4 : index
    %4 = memref.load %arg1[%c0_4, %c4] : memref<2x9xf32, #tpu.memory_space<smem>>
    %c0_5 = arith.constant 0 : index
    %c5 = arith.constant 5 : index
    %5 = memref.load %arg1[%c0_5, %c5] : memref<2x9xf32, #tpu.memory_space<smem>>
    %c0_6 = arith.constant 0 : index
    %c6 = arith.constant 6 : index
    %6 = memref.load %arg1[%c0_6, %c6] : memref<2x9xf32, #tpu.memory_space<smem>>
    %c0_7 = arith.constant 0 : index
    %c7 = arith.constant 7 : index
    %7 = memref.load %arg1[%c0_7, %c7] : memref<2x9xf32, #tpu.memory_space<smem>>
    %c0_8 = arith.constant 0 : index
    %c8 = arith.constant 8 : index
    %8 = memref.load %arg1[%c0_8, %c8] : memref<2x9xf32, #tpu.memory_space<smem>>
    %c1_9 = arith.constant 1 : index
    %c0_10 = arith.constant 0 : index
    %9 = memref.load %arg1[%c1_9, %c0_10] : memref<2x9xf32, #tpu.memory_space<smem>>
    %c1_11 = arith.constant 1 : index
    %c1_12 = arith.constant 1 : index
    %10 = memref.load %arg1[%c1_11, %c1_12] : memref<2x9xf32, #tpu.memory_space<smem>>
    %c1_13 = arith.constant 1 : index
    %c2_14 = arith.constant 2 : index
    %11 = memref.load %arg1[%c1_13, %c2_14] : memref<2x9xf32, #tpu.memory_space<smem>>
    %c1_15 = arith.constant 1 : index
    %c3_16 = arith.constant 3 : index
    %12 = memref.load %arg1[%c1_15, %c3_16] : memref<2x9xf32, #tpu.memory_space<smem>>
    %c1_17 = arith.constant 1 : index
    %c4_18 = arith.constant 4 : index
    %13 = memref.load %arg1[%c1_17, %c4_18] : memref<2x9xf32, #tpu.memory_space<smem>>
    %c1_19 = arith.constant 1 : index
    %c5_20 = arith.constant 5 : index
    %14 = memref.load %arg1[%c1_19, %c5_20] : memref<2x9xf32, #tpu.memory_space<smem>>
    %c1_21 = arith.constant 1 : index
    %c6_22 = arith.constant 6 : index
    %15 = memref.load %arg1[%c1_21, %c6_22] : memref<2x9xf32, #tpu.memory_space<smem>>
    %c1_23 = arith.constant 1 : index
    %c7_24 = arith.constant 7 : index
    %16 = memref.load %arg1[%c1_23, %c7_24] : memref<2x9xf32, #tpu.memory_space<smem>>
    %c1_25 = arith.constant 1 : index
    %c8_26 = arith.constant 8 : index
    %17 = memref.load %arg1[%c1_25, %c8_26] : memref<2x9xf32, #tpu.memory_space<smem>>
    %c0_27 = arith.constant 0 : index
    %18 = memref.load %arg2[%c0_27] : memref<9xf32, #tpu.memory_space<smem>>
    %c1_28 = arith.constant 1 : index
    %19 = memref.load %arg2[%c1_28] : memref<9xf32, #tpu.memory_space<smem>>
    %c2_29 = arith.constant 2 : index
    %20 = memref.load %arg2[%c2_29] : memref<9xf32, #tpu.memory_space<smem>>
    %c3_30 = arith.constant 3 : index
    %21 = memref.load %arg2[%c3_30] : memref<9xf32, #tpu.memory_space<smem>>
    %c4_31 = arith.constant 4 : index
    %22 = memref.load %arg2[%c4_31] : memref<9xf32, #tpu.memory_space<smem>>
    %c5_32 = arith.constant 5 : index
    %23 = memref.load %arg2[%c5_32] : memref<9xf32, #tpu.memory_space<smem>>
    %c6_33 = arith.constant 6 : index
    %24 = memref.load %arg2[%c6_33] : memref<9xf32, #tpu.memory_space<smem>>
    %c7_34 = arith.constant 7 : index
    %25 = memref.load %arg2[%c7_34] : memref<9xf32, #tpu.memory_space<smem>>
    %c8_35 = arith.constant 8 : index
    %26 = memref.load %arg2[%c8_35] : memref<9xf32, #tpu.memory_space<smem>>
    %c0_36 = arith.constant 0 : index
    %c0_37 = arith.constant 0 : index
    %27 = memref.load %arg3[%c0_36, %c0_37] : memref<9x5xf32, #tpu.memory_space<smem>>
    %c0_38 = arith.constant 0 : index
    %c1_39 = arith.constant 1 : index
    %28 = memref.load %arg3[%c0_38, %c1_39] : memref<9x5xf32, #tpu.memory_space<smem>>
    %c0_40 = arith.constant 0 : index
    %c2_41 = arith.constant 2 : index
    %29 = memref.load %arg3[%c0_40, %c2_41] : memref<9x5xf32, #tpu.memory_space<smem>>
    %c0_42 = arith.constant 0 : index
    %c3_43 = arith.constant 3 : index
    %30 = memref.load %arg3[%c0_42, %c3_43] : memref<9x5xf32, #tpu.memory_space<smem>>
    %c0_44 = arith.constant 0 : index
    %c4_45 = arith.constant 4 : index
    %31 = memref.load %arg3[%c0_44, %c4_45] : memref<9x5xf32, #tpu.memory_space<smem>>
    %c1_46 = arith.constant 1 : index
    %c0_47 = arith.constant 0 : index
    %32 = memref.load %arg3[%c1_46, %c0_47] : memref<9x5xf32, #tpu.memory_space<smem>>
    %c1_48 = arith.constant 1 : index
    %c1_49 = arith.constant 1 : index
    %33 = memref.load %arg3[%c1_48, %c1_49] : memref<9x5xf32, #tpu.memory_space<smem>>
    %c1_50 = arith.constant 1 : index
    %c2_51 = arith.constant 2 : index
    %34 = memref.load %arg3[%c1_50, %c2_51] : memref<9x5xf32, #tpu.memory_space<smem>>
    %c1_52 = arith.constant 1 : index
    %c3_53 = arith.constant 3 : index
    %35 = memref.load %arg3[%c1_52, %c3_53] : memref<9x5xf32, #tpu.memory_space<smem>>
    %c1_54 = arith.constant 1 : index
    %c4_55 = arith.constant 4 : index
    %36 = memref.load %arg3[%c1_54, %c4_55] : memref<9x5xf32, #tpu.memory_space<smem>>
    %c2_56 = arith.constant 2 : index
    %c0_57 = arith.constant 0 : index
    %37 = memref.load %arg3[%c2_56, %c0_57] : memref<9x5xf32, #tpu.memory_space<smem>>
    %c2_58 = arith.constant 2 : index
    %c1_59 = arith.constant 1 : index
    %38 = memref.load %arg3[%c2_58, %c1_59] : memref<9x5xf32, #tpu.memory_space<smem>>
    %c2_60 = arith.constant 2 : index
    %c2_61 = arith.constant 2 : index
    %39 = memref.load %arg3[%c2_60, %c2_61] : memref<9x5xf32, #tpu.memory_space<smem>>
    %c2_62 = arith.constant 2 : index
    %c3_63 = arith.constant 3 : index
    %40 = memref.load %arg3[%c2_62, %c3_63] : memref<9x5xf32, #tpu.memory_space<smem>>
    %c2_64 = arith.constant 2 : index
    %c4_65 = arith.constant 4 : index
    %41 = memref.load %arg3[%c2_64, %c4_65] : memref<9x5xf32, #tpu.memory_space<smem>>
    %c3_66 = arith.constant 3 : index
    %c0_67 = arith.constant 0 : index
    %42 = memref.load %arg3[%c3_66, %c0_67] : memref<9x5xf32, #tpu.memory_space<smem>>
    %c3_68 = arith.constant 3 : index
    %c1_69 = arith.constant 1 : index
    %43 = memref.load %arg3[%c3_68, %c1_69] : memref<9x5xf32, #tpu.memory_space<smem>>
    %c3_70 = arith.constant 3 : index
    %c2_71 = arith.constant 2 : index
    %44 = memref.load %arg3[%c3_70, %c2_71] : memref<9x5xf32, #tpu.memory_space<smem>>
    %c3_72 = arith.constant 3 : index
    %c3_73 = arith.constant 3 : index
    %45 = memref.load %arg3[%c3_72, %c3_73] : memref<9x5xf32, #tpu.memory_space<smem>>
    %c3_74 = arith.constant 3 : index
    %c4_75 = arith.constant 4 : index
    %46 = memref.load %arg3[%c3_74, %c4_75] : memref<9x5xf32, #tpu.memory_space<smem>>
    %c4_76 = arith.constant 4 : index
    %c0_77 = arith.constant 0 : index
    %47 = memref.load %arg3[%c4_76, %c0_77] : memref<9x5xf32, #tpu.memory_space<smem>>
    %c4_78 = arith.constant 4 : index
    %c1_79 = arith.constant 1 : index
    %48 = memref.load %arg3[%c4_78, %c1_79] : memref<9x5xf32, #tpu.memory_space<smem>>
    %c4_80 = arith.constant 4 : index
    %c2_81 = arith.constant 2 : index
    %49 = memref.load %arg3[%c4_80, %c2_81] : memref<9x5xf32, #tpu.memory_space<smem>>
    %c4_82 = arith.constant 4 : index
    %c3_83 = arith.constant 3 : index
    %50 = memref.load %arg3[%c4_82, %c3_83] : memref<9x5xf32, #tpu.memory_space<smem>>
    %c4_84 = arith.constant 4 : index
    %c4_85 = arith.constant 4 : index
    %51 = memref.load %arg3[%c4_84, %c4_85] : memref<9x5xf32, #tpu.memory_space<smem>>
    %c5_86 = arith.constant 5 : index
    %c0_87 = arith.constant 0 : index
    %52 = memref.load %arg3[%c5_86, %c0_87] : memref<9x5xf32, #tpu.memory_space<smem>>
    %c5_88 = arith.constant 5 : index
    %c1_89 = arith.constant 1 : index
    %53 = memref.load %arg3[%c5_88, %c1_89] : memref<9x5xf32, #tpu.memory_space<smem>>
    %c5_90 = arith.constant 5 : index
    %c2_91 = arith.constant 2 : index
    %54 = memref.load %arg3[%c5_90, %c2_91] : memref<9x5xf32, #tpu.memory_space<smem>>
    %c5_92 = arith.constant 5 : index
    %c3_93 = arith.constant 3 : index
    %55 = memref.load %arg3[%c5_92, %c3_93] : memref<9x5xf32, #tpu.memory_space<smem>>
    %c5_94 = arith.constant 5 : index
    %c4_95 = arith.constant 4 : index
    %56 = memref.load %arg3[%c5_94, %c4_95] : memref<9x5xf32, #tpu.memory_space<smem>>
    %c6_96 = arith.constant 6 : index
    %c0_97 = arith.constant 0 : index
    %57 = memref.load %arg3[%c6_96, %c0_97] : memref<9x5xf32, #tpu.memory_space<smem>>
    %c6_98 = arith.constant 6 : index
    %c1_99 = arith.constant 1 : index
    %58 = memref.load %arg3[%c6_98, %c1_99] : memref<9x5xf32, #tpu.memory_space<smem>>
    %c6_100 = arith.constant 6 : index
    %c2_101 = arith.constant 2 : index
    %59 = memref.load %arg3[%c6_100, %c2_101] : memref<9x5xf32, #tpu.memory_space<smem>>
    %c6_102 = arith.constant 6 : index
    %c3_103 = arith.constant 3 : index
    %60 = memref.load %arg3[%c6_102, %c3_103] : memref<9x5xf32, #tpu.memory_space<smem>>
    %c6_104 = arith.constant 6 : index
    %c4_105 = arith.constant 4 : index
    %61 = memref.load %arg3[%c6_104, %c4_105] : memref<9x5xf32, #tpu.memory_space<smem>>
    %c7_106 = arith.constant 7 : index
    %c0_107 = arith.constant 0 : index
    %62 = memref.load %arg3[%c7_106, %c0_107] : memref<9x5xf32, #tpu.memory_space<smem>>
    %c7_108 = arith.constant 7 : index
    %c1_109 = arith.constant 1 : index
    %63 = memref.load %arg3[%c7_108, %c1_109] : memref<9x5xf32, #tpu.memory_space<smem>>
    %c7_110 = arith.constant 7 : index
    %c2_111 = arith.constant 2 : index
    %64 = memref.load %arg3[%c7_110, %c2_111] : memref<9x5xf32, #tpu.memory_space<smem>>
    %c7_112 = arith.constant 7 : index
    %c3_113 = arith.constant 3 : index
    %65 = memref.load %arg3[%c7_112, %c3_113] : memref<9x5xf32, #tpu.memory_space<smem>>
    %c7_114 = arith.constant 7 : index
    %c4_115 = arith.constant 4 : index
    %66 = memref.load %arg3[%c7_114, %c4_115] : memref<9x5xf32, #tpu.memory_space<smem>>
    %c8_116 = arith.constant 8 : index
    %c0_117 = arith.constant 0 : index
    %67 = memref.load %arg3[%c8_116, %c0_117] : memref<9x5xf32, #tpu.memory_space<smem>>
    %c8_118 = arith.constant 8 : index
    %c1_119 = arith.constant 1 : index
    %68 = memref.load %arg3[%c8_118, %c1_119] : memref<9x5xf32, #tpu.memory_space<smem>>
    %c8_120 = arith.constant 8 : index
    %c2_121 = arith.constant 2 : index
    %69 = memref.load %arg3[%c8_120, %c2_121] : memref<9x5xf32, #tpu.memory_space<smem>>
    %c8_122 = arith.constant 8 : index
    %c3_123 = arith.constant 3 : index
    %70 = memref.load %arg3[%c8_122, %c3_123] : memref<9x5xf32, #tpu.memory_space<smem>>
    %c8_124 = arith.constant 8 : index
    %c4_125 = arith.constant 4 : index
    %71 = memref.load %arg3[%c8_124, %c4_125] : memref<9x5xf32, #tpu.memory_space<smem>>
    %c0_126 = arith.constant 0 : index
    %72 = memref.load %arg4[%c0_126] : memref<5xf32, #tpu.memory_space<smem>>
    %c1_127 = arith.constant 1 : index
    %73 = memref.load %arg4[%c1_127] : memref<5xf32, #tpu.memory_space<smem>>
    %c2_128 = arith.constant 2 : index
    %74 = memref.load %arg4[%c2_128] : memref<5xf32, #tpu.memory_space<smem>>
    %c3_129 = arith.constant 3 : index
    %75 = memref.load %arg4[%c3_129] : memref<5xf32, #tpu.memory_space<smem>>
    %c4_130 = arith.constant 4 : index
    %76 = memref.load %arg4[%c4_130] : memref<5xf32, #tpu.memory_space<smem>>
    %c0_131 = arith.constant 0 : index
    %c0_132 = arith.constant 0 : index
    %77 = memref.load %arg5[%c0_131, %c0_132] : memref<5x1xf32, #tpu.memory_space<smem>>
    %c1_133 = arith.constant 1 : index
    %c0_134 = arith.constant 0 : index
    %78 = memref.load %arg5[%c1_133, %c0_134] : memref<5x1xf32, #tpu.memory_space<smem>>
    %c2_135 = arith.constant 2 : index
    %c0_136 = arith.constant 0 : index
    %79 = memref.load %arg5[%c2_135, %c0_136] : memref<5x1xf32, #tpu.memory_space<smem>>
    %c3_137 = arith.constant 3 : index
    %c0_138 = arith.constant 0 : index
    %80 = memref.load %arg5[%c3_137, %c0_138] : memref<5x1xf32, #tpu.memory_space<smem>>
    %c4_139 = arith.constant 4 : index
    %c0_140 = arith.constant 0 : index
    %81 = memref.load %arg5[%c4_139, %c0_140] : memref<5x1xf32, #tpu.memory_space<smem>>
    %c0_141 = arith.constant 0 : index
    %82 = memref.load %arg6[%c0_141] : memref<1xf32, #tpu.memory_space<smem>>
    %c0_i32 = arith.constant 0 : i32
    %c16_i32 = arith.constant 16 : i32
    %83 = arith.muli %c0_i32, %c16_i32 : i32
    %84 = tpu.assume_multiple %83, 16 : i32
    %c0_142 = arith.constant 0 : index
    %85 = arith.index_cast %84 : i32 to index
    %c0_143 = arith.constant 0 : index
    %86 = vector.load %arg7[%c0_142, %85, %c0_143] : memref<2x16x128xf32, #tpu.memory_space<vmem>>, vector<1x16x128xf32>
    %87 = vector.shape_cast %86 : vector<1x16x128xf32> to vector<16x128xf32>
    %c1_144 = arith.constant 1 : index
    %88 = arith.index_cast %84 : i32 to index
    %c0_145 = arith.constant 0 : index
    %89 = vector.load %arg7[%c1_144, %88, %c0_145] : memref<2x16x128xf32, #tpu.memory_space<vmem>>, vector<1x16x128xf32>
    %90 = vector.shape_cast %89 : vector<1x16x128xf32> to vector<16x128xf32>
    %91 = vector.broadcast %0 : f32 to vector<16x128xf32>
    %92 = arith.mulf %87, %91 : vector<16x128xf32>
    %93 = vector.broadcast %9 : f32 to vector<16x128xf32>
    %94 = arith.mulf %90, %93 : vector<16x128xf32>
    %95 = arith.addf %92, %94 : vector<16x128xf32>
    %96 = vector.broadcast %18 : f32 to vector<16x128xf32>
    %97 = arith.addf %95, %96 : vector<16x128xf32>
    %cst = arith.constant 0.000000e+00 : f32
    %98 = vector.broadcast %cst : f32 to vector<16x128xf32>
    %99 = arith.maximumf %97, %98 : vector<16x128xf32>
    %100 = vector.broadcast %1 : f32 to vector<16x128xf32>
    %101 = arith.mulf %87, %100 : vector<16x128xf32>
    %102 = vector.broadcast %10 : f32 to vector<16x128xf32>
    %103 = arith.mulf %90, %102 : vector<16x128xf32>
    %104 = arith.addf %101, %103 : vector<16x128xf32>
    %105 = vector.broadcast %19 : f32 to vector<16x128xf32>
    %106 = arith.addf %104, %105 : vector<16x128xf32>
    %cst_146 = arith.constant 0.000000e+00 : f32
    %107 = vector.broadcast %cst_146 : f32 to vector<16x128xf32>
    %108 = arith.maximumf %106, %107 : vector<16x128xf32>
    %109 = vector.broadcast %2 : f32 to vector<16x128xf32>
    %110 = arith.mulf %87, %109 : vector<16x128xf32>
    %111 = vector.broadcast %11 : f32 to vector<16x128xf32>
    %112 = arith.mulf %90, %111 : vector<16x128xf32>
    %113 = arith.addf %110, %112 : vector<16x128xf32>
    %114 = vector.broadcast %20 : f32 to vector<16x128xf32>
    %115 = arith.addf %113, %114 : vector<16x128xf32>
    %cst_147 = arith.constant 0.000000e+00 : f32
    %116 = vector.broadcast %cst_147 : f32 to vector<16x128xf32>
    %117 = arith.maximumf %115, %116 : vector<16x128xf32>
    %118 = vector.broadcast %3 : f32 to vector<16x128xf32>
    %119 = arith.mulf %87, %118 : vector<16x128xf32>
    %120 = vector.broadcast %12 : f32 to vector<16x128xf32>
    %121 = arith.mulf %90, %120 : vector<16x128xf32>
    %122 = arith.addf %119, %121 : vector<16x128xf32>
    %123 = vector.broadcast %21 : f32 to vector<16x128xf32>
    %124 = arith.addf %122, %123 : vector<16x128xf32>
    %cst_148 = arith.constant 0.000000e+00 : f32
    %125 = vector.broadcast %cst_148 : f32 to vector<16x128xf32>
    %126 = arith.maximumf %124, %125 : vector<16x128xf32>
    %127 = vector.broadcast %4 : f32 to vector<16x128xf32>
    %128 = arith.mulf %87, %127 : vector<16x128xf32>
    %129 = vector.broadcast %13 : f32 to vector<16x128xf32>
    %130 = arith.mulf %90, %129 : vector<16x128xf32>
    %131 = arith.addf %128, %130 : vector<16x128xf32>
    %132 = vector.broadcast %22 : f32 to vector<16x128xf32>
    %133 = arith.addf %131, %132 : vector<16x128xf32>
    %cst_149 = arith.constant 0.000000e+00 : f32
    %134 = vector.broadcast %cst_149 : f32 to vector<16x128xf32>
    %135 = arith.maximumf %133, %134 : vector<16x128xf32>
    %136 = vector.broadcast %5 : f32 to vector<16x128xf32>
    %137 = arith.mulf %87, %136 : vector<16x128xf32>
    %138 = vector.broadcast %14 : f32 to vector<16x128xf32>
    %139 = arith.mulf %90, %138 : vector<16x128xf32>
    %140 = arith.addf %137, %139 : vector<16x128xf32>
    %141 = vector.broadcast %23 : f32 to vector<16x128xf32>
    %142 = arith.addf %140, %141 : vector<16x128xf32>
    %cst_150 = arith.constant 0.000000e+00 : f32
    %143 = vector.broadcast %cst_150 : f32 to vector<16x128xf32>
    %144 = arith.maximumf %142, %143 : vector<16x128xf32>
    %145 = vector.broadcast %6 : f32 to vector<16x128xf32>
    %146 = arith.mulf %87, %145 : vector<16x128xf32>
    %147 = vector.broadcast %15 : f32 to vector<16x128xf32>
    %148 = arith.mulf %90, %147 : vector<16x128xf32>
    %149 = arith.addf %146, %148 : vector<16x128xf32>
    %150 = vector.broadcast %24 : f32 to vector<16x128xf32>
    %151 = arith.addf %149, %150 : vector<16x128xf32>
    %cst_151 = arith.constant 0.000000e+00 : f32
    %152 = vector.broadcast %cst_151 : f32 to vector<16x128xf32>
    %153 = arith.maximumf %151, %152 : vector<16x128xf32>
    %154 = vector.broadcast %7 : f32 to vector<16x128xf32>
    %155 = arith.mulf %87, %154 : vector<16x128xf32>
    %156 = vector.broadcast %16 : f32 to vector<16x128xf32>
    %157 = arith.mulf %90, %156 : vector<16x128xf32>
    %158 = arith.addf %155, %157 : vector<16x128xf32>
    %159 = vector.broadcast %25 : f32 to vector<16x128xf32>
    %160 = arith.addf %158, %159 : vector<16x128xf32>
    %cst_152 = arith.constant 0.000000e+00 : f32
    %161 = vector.broadcast %cst_152 : f32 to vector<16x128xf32>
    %162 = arith.maximumf %160, %161 : vector<16x128xf32>
    %163 = vector.broadcast %8 : f32 to vector<16x128xf32>
    %164 = arith.mulf %87, %163 : vector<16x128xf32>
    %165 = vector.broadcast %17 : f32 to vector<16x128xf32>
    %166 = arith.mulf %90, %165 : vector<16x128xf32>
    %167 = arith.addf %164, %166 : vector<16x128xf32>
    %168 = vector.broadcast %26 : f32 to vector<16x128xf32>
    %169 = arith.addf %167, %168 : vector<16x128xf32>
    %cst_153 = arith.constant 0.000000e+00 : f32
    %170 = vector.broadcast %cst_153 : f32 to vector<16x128xf32>
    %171 = arith.maximumf %169, %170 : vector<16x128xf32>
    %172 = vector.broadcast %27 : f32 to vector<16x128xf32>
    %173 = arith.mulf %99, %172 : vector<16x128xf32>
    %174 = vector.broadcast %32 : f32 to vector<16x128xf32>
    %175 = arith.mulf %108, %174 : vector<16x128xf32>
    %176 = arith.addf %173, %175 : vector<16x128xf32>
    %177 = vector.broadcast %37 : f32 to vector<16x128xf32>
    %178 = arith.mulf %117, %177 : vector<16x128xf32>
    %179 = arith.addf %176, %178 : vector<16x128xf32>
    %180 = vector.broadcast %42 : f32 to vector<16x128xf32>
    %181 = arith.mulf %126, %180 : vector<16x128xf32>
    %182 = arith.addf %179, %181 : vector<16x128xf32>
    %183 = vector.broadcast %47 : f32 to vector<16x128xf32>
    %184 = arith.mulf %135, %183 : vector<16x128xf32>
    %185 = arith.addf %182, %184 : vector<16x128xf32>
    %186 = vector.broadcast %52 : f32 to vector<16x128xf32>
    %187 = arith.mulf %144, %186 : vector<16x128xf32>
    %188 = arith.addf %185, %187 : vector<16x128xf32>
    %189 = vector.broadcast %57 : f32 to vector<16x128xf32>
    %190 = arith.mulf %153, %189 : vector<16x128xf32>
    %191 = arith.addf %188, %190 : vector<16x128xf32>
    %192 = vector.broadcast %62 : f32 to vector<16x128xf32>
    %193 = arith.mulf %162, %192 : vector<16x128xf32>
    %194 = arith.addf %191, %193 : vector<16x128xf32>
    %195 = vector.broadcast %67 : f32 to vector<16x128xf32>
    %196 = arith.mulf %171, %195 : vector<16x128xf32>
    %197 = arith.addf %194, %196 : vector<16x128xf32>
    %198 = vector.broadcast %72 : f32 to vector<16x128xf32>
    %199 = arith.addf %197, %198 : vector<16x128xf32>
    %cst_154 = arith.constant 0.000000e+00 : f32
    %200 = vector.broadcast %cst_154 : f32 to vector<16x128xf32>
    %201 = arith.maximumf %199, %200 : vector<16x128xf32>
    %202 = vector.broadcast %28 : f32 to vector<16x128xf32>
    %203 = arith.mulf %99, %202 : vector<16x128xf32>
    %204 = vector.broadcast %33 : f32 to vector<16x128xf32>
    %205 = arith.mulf %108, %204 : vector<16x128xf32>
    %206 = arith.addf %203, %205 : vector<16x128xf32>
    %207 = vector.broadcast %38 : f32 to vector<16x128xf32>
    %208 = arith.mulf %117, %207 : vector<16x128xf32>
    %209 = arith.addf %206, %208 : vector<16x128xf32>
    %210 = vector.broadcast %43 : f32 to vector<16x128xf32>
    %211 = arith.mulf %126, %210 : vector<16x128xf32>
    %212 = arith.addf %209, %211 : vector<16x128xf32>
    %213 = vector.broadcast %48 : f32 to vector<16x128xf32>
    %214 = arith.mulf %135, %213 : vector<16x128xf32>
    %215 = arith.addf %212, %214 : vector<16x128xf32>
    %216 = vector.broadcast %53 : f32 to vector<16x128xf32>
    %217 = arith.mulf %144, %216 : vector<16x128xf32>
    %218 = arith.addf %215, %217 : vector<16x128xf32>
    %219 = vector.broadcast %58 : f32 to vector<16x128xf32>
    %220 = arith.mulf %153, %219 : vector<16x128xf32>
    %221 = arith.addf %218, %220 : vector<16x128xf32>
    %222 = vector.broadcast %63 : f32 to vector<16x128xf32>
    %223 = arith.mulf %162, %222 : vector<16x128xf32>
    %224 = arith.addf %221, %223 : vector<16x128xf32>
    %225 = vector.broadcast %68 : f32 to vector<16x128xf32>
    %226 = arith.mulf %171, %225 : vector<16x128xf32>
    %227 = arith.addf %224, %226 : vector<16x128xf32>
    %228 = vector.broadcast %73 : f32 to vector<16x128xf32>
    %229 = arith.addf %227, %228 : vector<16x128xf32>
    %cst_155 = arith.constant 0.000000e+00 : f32
    %230 = vector.broadcast %cst_155 : f32 to vector<16x128xf32>
    %231 = arith.maximumf %229, %230 : vector<16x128xf32>
    %232 = vector.broadcast %29 : f32 to vector<16x128xf32>
    %233 = arith.mulf %99, %232 : vector<16x128xf32>
    %234 = vector.broadcast %34 : f32 to vector<16x128xf32>
    %235 = arith.mulf %108, %234 : vector<16x128xf32>
    %236 = arith.addf %233, %235 : vector<16x128xf32>
    %237 = vector.broadcast %39 : f32 to vector<16x128xf32>
    %238 = arith.mulf %117, %237 : vector<16x128xf32>
    %239 = arith.addf %236, %238 : vector<16x128xf32>
    %240 = vector.broadcast %44 : f32 to vector<16x128xf32>
    %241 = arith.mulf %126, %240 : vector<16x128xf32>
    %242 = arith.addf %239, %241 : vector<16x128xf32>
    %243 = vector.broadcast %49 : f32 to vector<16x128xf32>
    %244 = arith.mulf %135, %243 : vector<16x128xf32>
    %245 = arith.addf %242, %244 : vector<16x128xf32>
    %246 = vector.broadcast %54 : f32 to vector<16x128xf32>
    %247 = arith.mulf %144, %246 : vector<16x128xf32>
    %248 = arith.addf %245, %247 : vector<16x128xf32>
    %249 = vector.broadcast %59 : f32 to vector<16x128xf32>
    %250 = arith.mulf %153, %249 : vector<16x128xf32>
    %251 = arith.addf %248, %250 : vector<16x128xf32>
    %252 = vector.broadcast %64 : f32 to vector<16x128xf32>
    %253 = arith.mulf %162, %252 : vector<16x128xf32>
    %254 = arith.addf %251, %253 : vector<16x128xf32>
    %255 = vector.broadcast %69 : f32 to vector<16x128xf32>
    %256 = arith.mulf %171, %255 : vector<16x128xf32>
    %257 = arith.addf %254, %256 : vector<16x128xf32>
    %258 = vector.broadcast %74 : f32 to vector<16x128xf32>
    %259 = arith.addf %257, %258 : vector<16x128xf32>
    %cst_156 = arith.constant 0.000000e+00 : f32
    %260 = vector.broadcast %cst_156 : f32 to vector<16x128xf32>
    %261 = arith.maximumf %259, %260 : vector<16x128xf32>
    %262 = vector.broadcast %30 : f32 to vector<16x128xf32>
    %263 = arith.mulf %99, %262 : vector<16x128xf32>
    %264 = vector.broadcast %35 : f32 to vector<16x128xf32>
    %265 = arith.mulf %108, %264 : vector<16x128xf32>
    %266 = arith.addf %263, %265 : vector<16x128xf32>
    %267 = vector.broadcast %40 : f32 to vector<16x128xf32>
    %268 = arith.mulf %117, %267 : vector<16x128xf32>
    %269 = arith.addf %266, %268 : vector<16x128xf32>
    %270 = vector.broadcast %45 : f32 to vector<16x128xf32>
    %271 = arith.mulf %126, %270 : vector<16x128xf32>
    %272 = arith.addf %269, %271 : vector<16x128xf32>
    %273 = vector.broadcast %50 : f32 to vector<16x128xf32>
    %274 = arith.mulf %135, %273 : vector<16x128xf32>
    %275 = arith.addf %272, %274 : vector<16x128xf32>
    %276 = vector.broadcast %55 : f32 to vector<16x128xf32>
    %277 = arith.mulf %144, %276 : vector<16x128xf32>
    %278 = arith.addf %275, %277 : vector<16x128xf32>
    %279 = vector.broadcast %60 : f32 to vector<16x128xf32>
    %280 = arith.mulf %153, %279 : vector<16x128xf32>
    %281 = arith.addf %278, %280 : vector<16x128xf32>
    %282 = vector.broadcast %65 : f32 to vector<16x128xf32>
    %283 = arith.mulf %162, %282 : vector<16x128xf32>
    %284 = arith.addf %281, %283 : vector<16x128xf32>
    %285 = vector.broadcast %70 : f32 to vector<16x128xf32>
    %286 = arith.mulf %171, %285 : vector<16x128xf32>
    %287 = arith.addf %284, %286 : vector<16x128xf32>
    %288 = vector.broadcast %75 : f32 to vector<16x128xf32>
    %289 = arith.addf %287, %288 : vector<16x128xf32>
    %cst_157 = arith.constant 0.000000e+00 : f32
    %290 = vector.broadcast %cst_157 : f32 to vector<16x128xf32>
    %291 = arith.maximumf %289, %290 : vector<16x128xf32>
    %292 = vector.broadcast %31 : f32 to vector<16x128xf32>
    %293 = arith.mulf %99, %292 : vector<16x128xf32>
    %294 = vector.broadcast %36 : f32 to vector<16x128xf32>
    %295 = arith.mulf %108, %294 : vector<16x128xf32>
    %296 = arith.addf %293, %295 : vector<16x128xf32>
    %297 = vector.broadcast %41 : f32 to vector<16x128xf32>
    %298 = arith.mulf %117, %297 : vector<16x128xf32>
    %299 = arith.addf %296, %298 : vector<16x128xf32>
    %300 = vector.broadcast %46 : f32 to vector<16x128xf32>
    %301 = arith.mulf %126, %300 : vector<16x128xf32>
    %302 = arith.addf %299, %301 : vector<16x128xf32>
    %303 = vector.broadcast %51 : f32 to vector<16x128xf32>
    %304 = arith.mulf %135, %303 : vector<16x128xf32>
    %305 = arith.addf %302, %304 : vector<16x128xf32>
    %306 = vector.broadcast %56 : f32 to vector<16x128xf32>
    %307 = arith.mulf %144, %306 : vector<16x128xf32>
    %308 = arith.addf %305, %307 : vector<16x128xf32>
    %309 = vector.broadcast %61 : f32 to vector<16x128xf32>
    %310 = arith.mulf %153, %309 : vector<16x128xf32>
    %311 = arith.addf %308, %310 : vector<16x128xf32>
    %312 = vector.broadcast %66 : f32 to vector<16x128xf32>
    %313 = arith.mulf %162, %312 : vector<16x128xf32>
    %314 = arith.addf %311, %313 : vector<16x128xf32>
    %315 = vector.broadcast %71 : f32 to vector<16x128xf32>
    %316 = arith.mulf %171, %315 : vector<16x128xf32>
    %317 = arith.addf %314, %316 : vector<16x128xf32>
    %318 = vector.broadcast %76 : f32 to vector<16x128xf32>
    %319 = arith.addf %317, %318 : vector<16x128xf32>
    %cst_158 = arith.constant 0.000000e+00 : f32
    %320 = vector.broadcast %cst_158 : f32 to vector<16x128xf32>
    %321 = arith.maximumf %319, %320 : vector<16x128xf32>
    %322 = vector.broadcast %77 : f32 to vector<16x128xf32>
    %323 = arith.mulf %201, %322 : vector<16x128xf32>
    %324 = vector.broadcast %78 : f32 to vector<16x128xf32>
    %325 = arith.mulf %231, %324 : vector<16x128xf32>
    %326 = arith.addf %323, %325 : vector<16x128xf32>
    %327 = vector.broadcast %79 : f32 to vector<16x128xf32>
    %328 = arith.mulf %261, %327 : vector<16x128xf32>
    %329 = arith.addf %326, %328 : vector<16x128xf32>
    %330 = vector.broadcast %80 : f32 to vector<16x128xf32>
    %331 = arith.mulf %291, %330 : vector<16x128xf32>
    %332 = arith.addf %329, %331 : vector<16x128xf32>
    %333 = vector.broadcast %81 : f32 to vector<16x128xf32>
    %334 = arith.mulf %321, %333 : vector<16x128xf32>
    %335 = arith.addf %332, %334 : vector<16x128xf32>
    %336 = vector.broadcast %82 : f32 to vector<16x128xf32>
    %337 = arith.addf %335, %336 : vector<16x128xf32>
    %338 = arith.index_cast %84 : i32 to index
    %c0_159 = arith.constant 0 : index
    %339 = vector.load %arg8[%338, %c0_159] : memref<16x128xf32, #tpu.memory_space<vmem>>, vector<16x128xf32>
    tpu.vector_store %arg8[%338, %c0_159], %337 {strides = array<i32>} : memref<16x128xf32, #tpu.memory_space<vmem>>, vector<16x128xf32>,
    %c1_i32 = arith.constant 1 : i32
    return
  }
  func.func @transform_0(%arg0: i32) -> (i32, i32) {
    %c0_i32 = arith.constant 0 : i32
    %c0_i32_0 = arith.constant 0 : i32
    %c0_i32_1 = arith.constant 0 : i32
    return %c0_i32, %c0_i32_0 : i32, i32
  }
  func.func @transform_1(%arg0: i32) -> i32 {
    %c0_i32 = arith.constant 0 : i32
    %c0_i32_0 = arith.constant 0 : i32
    return %c0_i32 : i32
  }
  func.func @transform_2(%arg0: i32) -> (i32, i32) {
    %c0_i32 = arith.constant 0 : i32
    %c0_i32_0 = arith.constant 0 : i32
    %c0_i32_1 = arith.constant 0 : i32
    return %c0_i32, %c0_i32_0 : i32, i32
  }
  func.func @transform_3(%arg0: i32) -> i32 {
    %c0_i32 = arith.constant 0 : i32
    %c0_i32_0 = arith.constant 0 : i32
    return %c0_i32 : i32
  }
  func.func @transform_4(%arg0: i32) -> (i32, i32) {
    %c0_i32 = arith.constant 0 : i32
    %c0_i32_0 = arith.constant 0 : i32
    %c0_i32_1 = arith.constant 0 : i32
    return %c0_i32, %c0_i32_0 : i32, i32
  }
  func.func @transform_5(%arg0: i32) -> i32 {
    %c0_i32 = arith.constant 0 : i32
    %c0_i32_0 = arith.constant 0 : i32
    return %c0_i32 : i32
  }
  func.func @transform_6(%arg0: i32) -> (i32, i32, i32) {
    %c0_i32 = arith.constant 0 : i32
    %c0_i32_0 = arith.constant 0 : i32
    %c0_i32_1 = arith.constant 0 : i32
    return %c0_i32, %arg0, %c0_i32_0 : i32, i32, i32
  }
  func.func @transform_7(%arg0: i32) -> (i32, i32) {
    %c0_i32 = arith.constant 0 : i32
    %c0_i32_0 = arith.constant 0 : i32
    return %arg0, %c0_i32 : i32, i32
  }
}

</mosaic_0001>

<llo_original>
// kernel: mlp_forward.1
$region0: #{mlp_forward.1}
  #allocation0 [shape = 'u32[]', space=smem, size = 0x4, offset = 0x4, fixed_abs, tag = 'smem constant byte address 0x4 - core index']
  #allocation1 [shape = 'u32[72,128]{1,0:T(1,128)}', space=vmem, size = 0x9000, scoped, tag = 'internal scratch']
  #allocation2 [shape = 'f32[1]{0:T(128)S(6)}', space=smem, size = 0x200, scoped, tag = 'scoped memory for mlp_forward.1']
  %s0 = inlined_call_operand.vmem [shape: f32[2,9], index: 0, kind: input, shape index: {}]
  %s1 = inlined_call_operand.vmem [shape: f32[9], index: 1, kind: input, shape index: {}]
  %s2 = inlined_call_operand.vmem [shape: f32[9,5], index: 2, kind: input, shape index: {}]
  %s3 = inlined_call_operand.vmem [shape: f32[5], index: 3, kind: input, shape index: {}]
  %s4 = inlined_call_operand.vmem [shape: f32[5,1], index: 4, kind: input, shape index: {}]
  %s5 = inlined_call_operand.<no memory space> [shape: f32[1], index: 5, kind: input, shape index: {}]
  %s6 = inlined_call_operand.vmem [shape: f32[2,16,128], index: 6, kind: input, shape index: {}]
  %s7 = inlined_call_operand.vmem [shape: f32[16,128], index: 7, kind: output, shape index: {}]
  %s8 = sld [smem:[#allocation0]]
  $region58: #{mlp_forward.1} parent=0
    _
  %s10 = ssub.s32 1, %s8
  %s11 = scalar_select 0, %s10, %s8
  %12 = sst [smem:[#allocation2]] %s5
  $region1: #{mlp_forward.1} parent=0
    #allocation3 [shape = 'u8[1024]{0}', space=smem, size = 0x400, scoped, tag = 'input window, operand 0, single buffered']
    #allocation4 [shape = 's32[1]{0}', space=sflag, size = 0x4, scoped, tag = 'scoped memory for mlp_forward.1']
    #allocation5 [shape = 'u8[512]{0}', space=smem, size = 0x200, scoped, tag = 'input window, operand 1, single buffered']
    #allocation6 [shape = 's32[1]{0}', space=sflag, size = 0x4, scoped, tag = 'scoped memory for mlp_forward.1']
    #allocation7 [shape = 'u8[8192]{0}', space=smem, size = 0x2000, scoped, tag = 'input window, operand 2, single buffered']
    #allocation8 [shape = 'u8[512]{0}', space=smem, size = 0x200, scoped, tag = 'input window, operand 3, single buffered']
    #allocation9 [shape = 's32[1]{0}', space=sflag, size = 0x4, scoped, tag = 'scoped memory for mlp_forward.1']
    #allocation10 [shape = 'u8[4096]{0}', space=smem, size = 0x1000, scoped, tag = 'input window, operand 4, single buffered']
    %13 = vsyncpa [#allocation4], 0
    %14 = vsyncpa [#allocation6], 0
    %15 = vsyncpa [#allocation9], 0
    // Predicated region
    $region2: #{mlp_forward.1} parent=1 // pred_check
      _
    $region3: #{mlp_forward.1} parent=1 // pred_check_branch
      %17 = sbr.rel (0) target = $region5
    $region4: #{mlp_forward.1} parent=1 // pred_region
      %19 = vsyncadd [#allocation4], 0
      %s21 = sshll.u32 %s0, 4
      %s22 = int_to_ptr.vmem [resolvable:$true] %s21
      %24 = dma.vmem_to_smem %s22, 32, [#allocation3], [#allocation4]
    $region5: #{mlp_forward.1} parent=1 // pred_fallthru
      _
    // Predicated region
    $region6: #{mlp_forward.1} parent=1 // pred_check
      _
    $region7: #{mlp_forward.1} parent=1 // pred_check_branch
      %26 = sbr.rel (0) target = $region9
    $region8: #{mlp_forward.1} parent=1 // pred_region
      %28 = vsyncadd [#allocation6], 0
      %s30 = sshll.u32 %s1, 4
      %s31 = int_to_ptr.vmem [resolvable:$true] %s30
      %33 = dma.vmem_to_smem %s31, 16, [#allocation5], [#allocation6]
    $region9: #{mlp_forward.1} parent=1 // pred_fallthru
      _
    // Predicated region
    $region10: #{mlp_forward.1} parent=1 // pred_check
      _
    $region11: #{mlp_forward.1} parent=1 // pred_check_branch
      %35 = sbr.rel (0) target = $region13
    $region12: #{mlp_forward.1} parent=1 // pred_region
      %37 = vsyncadd [#allocation6], 0
      %s38 = sshll.u32 %s2, 4
      %s39 = int_to_ptr.vmem [resolvable:$true] %s38
      %44 = dma.vmem_to_smem %s39, 256, [#allocation7], [#allocation6], 128, 128, 8
    $region13: #{mlp_forward.1} parent=1 // pred_fallthru
      _
    // Predicated region
    $region14: #{mlp_forward.1} parent=1 // pred_check
      _
    $region15: #{mlp_forward.1} parent=1 // pred_check_branch
      %46 = sbr.rel (0) target = $region17
    $region16: #{mlp_forward.1} parent=1 // pred_region
      %48 = vsyncadd [#allocation9], 0
      %s50 = sshll.u32 %s3, 4
      %s51 = int_to_ptr.vmem [resolvable:$true] %s50
      %53 = dma.vmem_to_smem %s51, 16, [#allocation8], [#allocation9]
    $region17: #{mlp_forward.1} parent=1 // pred_fallthru
      _
    // Predicated region
    $region18: #{mlp_forward.1} parent=1 // pred_check
      _
    $region19: #{mlp_forward.1} parent=1 // pred_check_branch
      %55 = sbr.rel (0) target = $region21
    $region20: #{mlp_forward.1} parent=1 // pred_region
      %57 = vsyncadd [#allocation9], 0
      %s59 = sshll.u32 %s4, 4
      %s60 = int_to_ptr.vmem [resolvable:$true] %s59
      %62 = dma.vmem_to_smem %s60, 128, [#allocation10], [#allocation9]
    $region21: #{mlp_forward.1} parent=1 // pred_fallthru
      _
    // Predicated region
    $region22: #{mlp_forward.1} parent=1 // pred_check
      _
    $region23: #{mlp_forward.1} parent=1 // pred_check_branch
      %64 = sbr.rel (0) target = $region25
    $region24: #{mlp_forward.1} parent=1 // pred_region
      _
    $region25: #{mlp_forward.1} parent=1 // pred_fallthru
      _
    // Predicated region
    $region26: #{mlp_forward.1} parent=1 // pred_check
      _
    $region27: #{mlp_forward.1} parent=1 // pred_check_branch
      %66 = sbr.rel (0) target = $region29
    $region28: #{mlp_forward.1} parent=1 // pred_region
      _
    $region29: #{mlp_forward.1} parent=1 // pred_fallthru
      _
    // Predicated region
    $region30: #{mlp_forward.1} parent=1 // pred_check
      _
    $region31: #{mlp_forward.1} parent=1 // pred_check_branch
      %68 = sbr.rel (0) target = $region33
    $region32: #{mlp_forward.1} parent=1 // pred_region
      %70 = dma.done [#allocation4], 32
    $region33: #{mlp_forward.1} parent=1 // pred_fallthru
      _
    // Predicated region
    $region34: #{mlp_forward.1} parent=1 // pred_check
      _
    $region35: #{mlp_forward.1} parent=1 // pred_check_branch
      %72 = sbr.rel (0) target = $region37
    $region36: #{mlp_forward.1} parent=1 // pred_region
      %74 = dma.done [#allocation6], 16
    $region37: #{mlp_forward.1} parent=1 // pred_fallthru
      _
    // Predicated region
    $region38: #{mlp_forward.1} parent=1 // pred_check
      _
    $region39: #{mlp_forward.1} parent=1 // pred_check_branch
      %76 = sbr.rel (0) target = $region41
    $region40: #{mlp_forward.1} parent=1 // pred_region
      %78 = dma.done [#allocation6], 256
    $region41: #{mlp_forward.1} parent=1 // pred_fallthru
      _
    // Predicated region
    $region42: #{mlp_forward.1} parent=1 // pred_check
      _
    $region43: #{mlp_forward.1} parent=1 // pred_check_branch
      %80 = sbr.rel (0) target = $region45
    $region44: #{mlp_forward.1} parent=1 // pred_region
      %82 = dma.done [#allocation9], 16
    $region45: #{mlp_forward.1} parent=1 // pred_fallthru
      _
    // Predicated region
    $region46: #{mlp_forward.1} parent=1 // pred_check
      _
    $region47: #{mlp_forward.1} parent=1 // pred_check_branch
      %84 = sbr.rel (0) target = $region49
    $region48: #{mlp_forward.1} parent=1 // pred_region
      %86 = dma.done [#allocation9], 128
    $region49: #{mlp_forward.1} parent=1 // pred_fallthru
      _
    %87 = sfence
    %s88 = sld [smem:[#allocation3]]
    %s89 = sld [smem:[#allocation3 + $0x1]]
    %s90 = sld [smem:[#allocation3 + $0x2]]
    %s91 = sld [smem:[#allocation3 + $0x3]]
    %s92 = sld [smem:[#allocation3 + $0x4]]
    %s93 = sld [smem:[#allocation3 + $0x5]]
    %s94 = sld [smem:[#allocation3 + $0x6]]
    %s95 = sld [smem:[#allocation3 + $0x7]]
    %s96 = sld [smem:[#allocation3 + $0x8]]
    %s97 = sld [smem:[#allocation3 + $0x80]]
    %s98 = sld [smem:[#allocation3 + $0x81]]
    %s99 = sld [smem:[#allocation3 + $0x82]]
    %s100 = sld [smem:[#allocation3 + $0x83]]
    %s101 = sld [smem:[#allocation3 + $0x84]]
    %s102 = sld [smem:[#allocation3 + $0x85]]
    %s103 = sld [smem:[#allocation3 + $0x86]]
    %s104 = sld [smem:[#allocation3 + $0x87]]
    %s105 = sld [smem:[#allocation3 + $0x88]]
    %s106 = sld [smem:[#allocation5]]
    %s107 = sld [smem:[#allocation5 + $0x1]]
    %s108 = sld [smem:[#allocation5 + $0x2]]
    %s109 = sld [smem:[#allocation5 + $0x3]]
    %s110 = sld [smem:[#allocation5 + $0x4]]
    %s111 = sld [smem:[#allocation5 + $0x5]]
    %s112 = sld [smem:[#allocation5 + $0x6]]
    %s113 = sld [smem:[#allocation5 + $0x7]]
    %s114 = sld [smem:[#allocation5 + $0x8]]
    %s115 = sld [smem:[#allocation7]]
    %s116 = sld [smem:[#allocation7 + $0x1]]
    %s117 = sld [smem:[#allocation7 + $0x2]]
    %s118 = sld [smem:[#allocation7 + $0x3]]
    %s119 = sld [smem:[#allocation7 + $0x4]]
    %s120 = sld [smem:[#allocation7 + $0x80]]
    %s121 = sld [smem:[#allocation7 + $0x81]]
    %s122 = sld [smem:[#allocation7 + $0x82]]
    %s123 = sld [smem:[#allocation7 + $0x83]]
    %s124 = sld [smem:[#allocation7 + $0x84]]
    %s125 = sld [smem:[#allocation7 + $0x100]]
    %s126 = sld [smem:[#allocation7 + $0x101]]
    %s127 = sld [smem:[#allocation7 + $0x102]]
    %s128 = sld [smem:[#allocation7 + $0x103]]
    %s129 = sld [smem:[#allocation7 + $0x104]]
    %s130 = sld [smem:[#allocation7 + $0x180]]
    %s131 = sld [smem:[#allocation7 + $0x181]]
    %s132 = sld [smem:[#allocation7 + $0x182]]
    %s133 = sld [smem:[#allocation7 + $0x183]]
    %s134 = sld [smem:[#allocation7 + $0x184]]
    %s135 = sld [smem:[#allocation7 + $0x200]]
    %s136 = sld [smem:[#allocation7 + $0x201]]
    %s137 = sld [smem:[#allocation7 + $0x202]]
    %s138 = sld [smem:[#allocation7 + $0x203]]
    %s139 = sld [smem:[#allocation7 + $0x204]]
    %s140 = sld [smem:[#allocation7 + $0x280]]
    %s141 = sld [smem:[#allocation7 + $0x281]]
    %s142 = sld [smem:[#allocation7 + $0x282]]
    %s143 = sld [smem:[#allocation7 + $0x283]]
    %s144 = sld [smem:[#allocation7 + $0x284]]
    %s145 = sld [smem:[#allocation7 + $0x300]]
    %s146 = sld [smem:[#allocation7 + $0x301]]
    %s147 = sld [smem:[#allocation7 + $0x302]]
    %s148 = sld [smem:[#allocation7 + $0x303]]
    %s149 = sld [smem:[#allocation7 + $0x304]]
    %s150 = sld [smem:[#allocation7 + $0x380]]
    %s151 = sld [smem:[#allocation7 + $0x381]]
    %s152 = sld [smem:[#allocation7 + $0x382]]
    %s153 = sld [smem:[#allocation7 + $0x383]]
    %s154 = sld [smem:[#allocation7 + $0x384]]
    %s155 = sld [smem:[#allocation7 + $0x400]]
    %s156 = sld [smem:[#allocation7 + $0x401]]
    %s157 = sld [smem:[#allocation7 + $0x402]]
    %s158 = sld [smem:[#allocation7 + $0x403]]
    %s159 = sld [smem:[#allocation7 + $0x404]]
    %s160 = sld [smem:[#allocation8]]
    %s161 = sld [smem:[#allocation8 + $0x1]]
    %s162 = sld [smem:[#allocation8 + $0x2]]
    %s163 = sld [smem:[#allocation8 + $0x3]]
    %s164 = sld [smem:[#allocation8 + $0x4]]
    %s165 = sld [smem:[#allocation10]]
    %s166 = sld [smem:[#allocation10 + $0x80]]
    %s167 = sld [smem:[#allocation10 + $0x100]]
    %s168 = sld [smem:[#allocation10 + $0x180]]
    %s169 = sld [smem:[#allocation10 + $0x200]]
    %s170 = sld [smem:[#allocation2]]
    %v171 = vld [vmem:[%s6] sm:$0xff]
    %v172 = vld [vmem:[%s6 + $0x8] sm:$0xff]
    %s173 = sadd.s32 0, 16
    %s174 = scalar_lea.vmem %s6, %s173
    %v175 = vld [vmem:[%s174] sm:$0xff]
    %v176 = vld [vmem:[%s174 + $0x8] sm:$0xff]
    %v177 = vstv %s88
    %v178 = vmul.f32 %v171, %v177
    %v179 = vmul.f32 %v172, %v177
    %v180 = vstv %s97
    %v181 = vmul.f32 %v175, %v180
    %v182 = vmul.f32 %v176, %v180
    %v183 = vadd.f32 %v178, %v181
    %v184 = vadd.f32 %v179, %v182
    %v185 = vstv %s106
    %v186 = vadd.f32 %v183, %v185
    %v187 = vadd.f32 %v184, %v185
    %v188 = vmax.f32 %v186, 0.0
    %v189 = vmax.f32 %v187, 0.0
    %v190 = vstv %s89
    %v191 = vmul.f32 %v171, %v190
    %v192 = vmul.f32 %v172, %v190
    %v193 = vstv %s98
    %v194 = vmul.f32 %v175, %v193
    %v195 = vmul.f32 %v176, %v193
    %v196 = vadd.f32 %v191, %v194
    %v197 = vadd.f32 %v192, %v195
    %v198 = vstv %s107
    %v199 = vadd.f32 %v196, %v198
    %v200 = vadd.f32 %v197, %v198
    %v201 = vmax.f32 %v199, 0.0
    %v202 = vmax.f32 %v200, 0.0
    %v203 = vstv %s90
    %v204 = vmul.f32 %v171, %v203
    %v205 = vmul.f32 %v172, %v203
    %v206 = vstv %s99
    %v207 = vmul.f32 %v175, %v206
    %v208 = vmul.f32 %v176, %v206
    %v209 = vadd.f32 %v204, %v207
    %v210 = vadd.f32 %v205, %v208
    %v211 = vstv %s108
    %v212 = vadd.f32 %v209, %v211
    %v213 = vadd.f32 %v210, %v211
    %v214 = vmax.f32 %v212, 0.0
    %v215 = vmax.f32 %v213, 0.0
    %v216 = vstv %s91
    %v217 = vmul.f32 %v171, %v216
    %v218 = vmul.f32 %v172, %v216
    %v219 = vstv %s100
    %v220 = vmul.f32 %v175, %v219
    %v221 = vmul.f32 %v176, %v219
    %v222 = vadd.f32 %v217, %v220
    %v223 = vadd.f32 %v218, %v221
    %v224 = vstv %s109
    %v225 = vadd.f32 %v222, %v224
    %v226 = vadd.f32 %v223, %v224
    %v227 = vmax.f32 %v225, 0.0
    %v228 = vmax.f32 %v226, 0.0
    %v229 = vstv %s92
    %v230 = vmul.f32 %v171, %v229
    %v231 = vmul.f32 %v172, %v229
    %v232 = vstv %s101
    %v233 = vmul.f32 %v175, %v232
    %v234 = vmul.f32 %v176, %v232
    %v235 = vadd.f32 %v230, %v233
    %v236 = vadd.f32 %v231, %v234
    %v237 = vstv %s110
    %v238 = vadd.f32 %v235, %v237
    %v239 = vadd.f32 %v236, %v237
    %v240 = vmax.f32 %v238, 0.0
    %v241 = vmax.f32 %v239, 0.0
    %v242 = vstv %s93
    %v243 = vmul.f32 %v171, %v242
    %v244 = vmul.f32 %v172, %v242
    %v245 = vstv %s102
    %v246 = vmul.f32 %v175, %v245
    %v247 = vmul.f32 %v176, %v245
    %v248 = vadd.f32 %v243, %v246
    %v249 = vadd.f32 %v244, %v247
    %v250 = vstv %s111
    %v251 = vadd.f32 %v248, %v250
    %v252 = vadd.f32 %v249, %v250
    %v253 = vmax.f32 %v251, 0.0
    %v254 = vmax.f32 %v252, 0.0
    %v255 = vstv %s94
    %v256 = vmul.f32 %v171, %v255
    %v257 = vmul.f32 %v172, %v255
    %v258 = vstv %s103
    %v259 = vmul.f32 %v175, %v258
    %v260 = vmul.f32 %v176, %v258
    %v261 = vadd.f32 %v256, %v259
    %v262 = vadd.f32 %v257, %v260
    %v263 = vstv %s112
    %v264 = vadd.f32 %v261, %v263
    %v265 = vadd.f32 %v262, %v263
    %v266 = vmax.f32 %v264, 0.0
    %v267 = vmax.f32 %v265, 0.0
    %v268 = vstv %s95
    %v269 = vmul.f32 %v171, %v268
    %v270 = vmul.f32 %v172, %v268
    %v271 = vstv %s104
    %v272 = vmul.f32 %v175, %v271
    %v273 = vmul.f32 %v176, %v271
    %v274 = vadd.f32 %v269, %v272
    %v275 = vadd.f32 %v270, %v273
    %v276 = vstv %s113
    %v277 = vadd.f32 %v274, %v276
    %v278 = vadd.f32 %v275, %v276
    %v279 = vmax.f32 %v277, 0.0
    %v280 = vmax.f32 %v278, 0.0
    %v281 = vstv %s96
    %v282 = vmul.f32 %v171, %v281
    %v283 = vmul.f32 %v172, %v281
    %v284 = vstv %s105
    %v285 = vmul.f32 %v175, %v284
    %v286 = vmul.f32 %v176, %v284
    %v287 = vadd.f32 %v282, %v285
    %v288 = vadd.f32 %v283, %v286
    %v289 = vstv %s114
    %v290 = vadd.f32 %v287, %v289
    %v291 = vadd.f32 %v288, %v289
    %v292 = vmax.f32 %v290, 0.0
    %v293 = vmax.f32 %v291, 0.0
    %v294 = vstv %s115
    %v295 = vmul.f32 %v188, %v294
    %v296 = vmul.f32 %v189, %v294
    %v297 = vstv %s120
    %v298 = vmul.f32 %v201, %v297
    %v299 = vmul.f32 %v202, %v297
    %v300 = vadd.f32 %v295, %v298
    %v301 = vadd.f32 %v296, %v299
    %v302 = vstv %s125
    %v303 = vmul.f32 %v214, %v302
    %v304 = vmul.f32 %v215, %v302
    %v305 = vadd.f32 %v300, %v303
    %v306 = vadd.f32 %v301, %v304
    %v307 = vstv %s130
    %v308 = vmul.f32 %v227, %v307
    %v309 = vmul.f32 %v228, %v307
    %v310 = vadd.f32 %v305, %v308
    %v311 = vadd.f32 %v306, %v309
    %v312 = vstv %s135
    %v313 = vmul.f32 %v240, %v312
    %v314 = vmul.f32 %v241, %v312
    %v315 = vadd.f32 %v310, %v313
    %v316 = vadd.f32 %v311, %v314
    %v317 = vstv %s140
    %v318 = vmul.f32 %v253, %v317
    %v319 = vmul.f32 %v254, %v317
    %v320 = vadd.f32 %v315, %v318
    %v321 = vadd.f32 %v316, %v319
    %v322 = vstv %s145
    %v323 = vmul.f32 %v266, %v322
    %v324 = vmul.f32 %v267, %v322
    %v325 = vadd.f32 %v320, %v323
    %v326 = vadd.f32 %v321, %v324
    %v327 = vstv %s150
    %v328 = vmul.f32 %v279, %v327
    %v329 = vmul.f32 %v280, %v327
    %v330 = vadd.f32 %v325, %v328
    %v331 = vadd.f32 %v326, %v329
    %v332 = vstv %s155
    %v333 = vmul.f32 %v292, %v332
    %v334 = vmul.f32 %v293, %v332
    %v335 = vadd.f32 %v330, %v333
    %v336 = vadd.f32 %v331, %v334
    %v337 = vstv %s160
    %v338 = vadd.f32 %v335, %v337
    %v339 = vadd.f32 %v336, %v337
    %v340 = vmax.f32 %v338, 0.0
    %v341 = vmax.f32 %v339, 0.0
    %v342 = vstv %s116
    %v343 = vmul.f32 %v188, %v342
    %v344 = vmul.f32 %v189, %v342
    %v345 = vstv %s121
    %v346 = vmul.f32 %v201, %v345
    %v347 = vmul.f32 %v202, %v345
    %v348 = vadd.f32 %v343, %v346
    %v349 = vadd.f32 %v344, %v347
    %v350 = vstv %s126
    %v351 = vmul.f32 %v214, %v350
    %v352 = vmul.f32 %v215, %v350
    %v353 = vadd.f32 %v348, %v351
    %v354 = vadd.f32 %v349, %v352
    %v355 = vstv %s131
    %v356 = vmul.f32 %v227, %v355
    %v357 = vmul.f32 %v228, %v355
    %v358 = vadd.f32 %v353, %v356
    %v359 = vadd.f32 %v354, %v357
    %v360 = vstv %s136
    %v361 = vmul.f32 %v240, %v360
    %v362 = vmul.f32 %v241, %v360
    %v363 = vadd.f32 %v358, %v361
    %v364 = vadd.f32 %v359, %v362
    %v365 = vstv %s141
    %v366 = vmul.f32 %v253, %v365
    %v367 = vmul.f32 %v254, %v365
    %v368 = vadd.f32 %v363, %v366
    %v369 = vadd.f32 %v364, %v367
    %v370 = vstv %s146
    %v371 = vmul.f32 %v266, %v370
    %v372 = vmul.f32 %v267, %v370
    %v373 = vadd.f32 %v368, %v371
    %v374 = vadd.f32 %v369, %v372
    %v375 = vstv %s151
    %v376 = vmul.f32 %v279, %v375
    %v377 = vmul.f32 %v280, %v375
    %v378 = vadd.f32 %v373, %v376
    %v379 = vadd.f32 %v374, %v377
    %v380 = vstv %s156
    %v381 = vmul.f32 %v292, %v380
    %v382 = vmul.f32 %v293, %v380
    %v383 = vadd.f32 %v378, %v381
    %v384 = vadd.f32 %v379, %v382
    %v385 = vstv %s161
    %v386 = vadd.f32 %v383, %v385
    %v387 = vadd.f32 %v384, %v385
    %v388 = vmax.f32 %v386, 0.0
    %v389 = vmax.f32 %v387, 0.0
    %v390 = vstv %s117
    %v391 = vmul.f32 %v188, %v390
    %v392 = vmul.f32 %v189, %v390
    %v393 = vstv %s122
    %v394 = vmul.f32 %v201, %v393
    %v395 = vmul.f32 %v202, %v393
    %v396 = vadd.f32 %v391, %v394
    %v397 = vadd.f32 %v392, %v395
    %v398 = vstv %s127
    %v399 = vmul.f32 %v214, %v398
    %v400 = vmul.f32 %v215, %v398
    %v401 = vadd.f32 %v396, %v399
    %v402 = vadd.f32 %v397, %v400
    %v403 = vstv %s132
    %v404 = vmul.f32 %v227, %v403
    %v405 = vmul.f32 %v228, %v403
    %v406 = vadd.f32 %v401, %v404
    %v407 = vadd.f32 %v402, %v405
    %v408 = vstv %s137
    %v409 = vmul.f32 %v240, %v408
    %v410 = vmul.f32 %v241, %v408
    %v411 = vadd.f32 %v406, %v409
    %v412 = vadd.f32 %v407, %v410
    %v413 = vstv %s142
    %v414 = vmul.f32 %v253, %v413
    %v415 = vmul.f32 %v254, %v413
    %v416 = vadd.f32 %v411, %v414
    %v417 = vadd.f32 %v412, %v415
    %v418 = vstv %s147
    %v419 = vmul.f32 %v266, %v418
    %v420 = vmul.f32 %v267, %v418
    %v421 = vadd.f32 %v416, %v419
    %v422 = vadd.f32 %v417, %v420
    %v423 = vstv %s152
    %v424 = vmul.f32 %v279, %v423
    %v425 = vmul.f32 %v280, %v423
    %v426 = vadd.f32 %v421, %v424
    %v427 = vadd.f32 %v422, %v425
    %v428 = vstv %s157
    %v429 = vmul.f32 %v292, %v428
    %v430 = vmul.f32 %v293, %v428
    %v431 = vadd.f32 %v426, %v429
    %v432 = vadd.f32 %v427, %v430
    %v433 = vstv %s162
    %v434 = vadd.f32 %v431, %v433
    %v435 = vadd.f32 %v432, %v433
    %v436 = vmax.f32 %v434, 0.0
    %v437 = vmax.f32 %v435, 0.0
    %v438 = vstv %s118
    %v439 = vmul.f32 %v188, %v438
    %v440 = vmul.f32 %v189, %v438
    %v441 = vstv %s123
    %v442 = vmul.f32 %v201, %v441
    %v443 = vmul.f32 %v202, %v441
    %v444 = vadd.f32 %v439, %v442
    %v445 = vadd.f32 %v440, %v443
    %v446 = vstv %s128
    %v447 = vmul.f32 %v214, %v446
    %v448 = vmul.f32 %v215, %v446
    %v449 = vadd.f32 %v444, %v447
    %v450 = vadd.f32 %v445, %v448
    %v451 = vstv %s133
    %v452 = vmul.f32 %v227, %v451
    %v453 = vmul.f32 %v228, %v451
    %v454 = vadd.f32 %v449, %v452
    %v455 = vadd.f32 %v450, %v453
    %v456 = vstv %s138
    %v457 = vmul.f32 %v240, %v456
    %v458 = vmul.f32 %v241, %v456
    %v459 = vadd.f32 %v454, %v457
    %v460 = vadd.f32 %v455, %v458
    %v461 = vstv %s143
    %v462 = vmul.f32 %v253, %v461
    %v463 = vmul.f32 %v254, %v461
    %v464 = vadd.f32 %v459, %v462
    %v465 = vadd.f32 %v460, %v463
    %v466 = vstv %s148
    %v467 = vmul.f32 %v266, %v466
    %v468 = vmul.f32 %v267, %v466
    %v469 = vadd.f32 %v464, %v467
    %v470 = vadd.f32 %v465, %v468
    %v471 = vstv %s153
    %v472 = vmul.f32 %v279, %v471
    %v473 = vmul.f32 %v280, %v471
    %v474 = vadd.f32 %v469, %v472
    %v475 = vadd.f32 %v470, %v473
    %v476 = vstv %s158
    %v477 = vmul.f32 %v292, %v476
    %v478 = vmul.f32 %v293, %v476
    %v479 = vadd.f32 %v474, %v477
    %v480 = vadd.f32 %v475, %v478
    %v481 = vstv %s163
    %v482 = vadd.f32 %v479, %v481
    %v483 = vadd.f32 %v480, %v481
    %v484 = vmax.f32 %v482, 0.0
    %v485 = vmax.f32 %v483, 0.0
    %v486 = vstv %s119
    %v487 = vmul.f32 %v188, %v486
    %v488 = vmul.f32 %v189, %v486
    %v489 = vstv %s124
    %v490 = vmul.f32 %v201, %v489
    %v491 = vmul.f32 %v202, %v489
    %v492 = vadd.f32 %v487, %v490
    %v493 = vadd.f32 %v488, %v491
    %v494 = vstv %s129
    %v495 = vmul.f32 %v214, %v494
    %v496 = vmul.f32 %v215, %v494
    %v497 = vadd.f32 %v492, %v495
    %v498 = vadd.f32 %v493, %v496
    %v499 = vstv %s134
    %v500 = vmul.f32 %v227, %v499
    %v501 = vmul.f32 %v228, %v499
    %v502 = vadd.f32 %v497, %v500
    %v503 = vadd.f32 %v498, %v501
    %v504 = vstv %s139
    %v505 = vmul.f32 %v240, %v504
    %v506 = vmul.f32 %v241, %v504
    %v507 = vadd.f32 %v502, %v505
    %v508 = vadd.f32 %v503, %v506
    %v509 = vstv %s144
    %v510 = vmul.f32 %v253, %v509
    %v511 = vmul.f32 %v254, %v509
    %v512 = vadd.f32 %v507, %v510
    %v513 = vadd.f32 %v508, %v511
    %v514 = vstv %s149
    %v515 = vmul.f32 %v266, %v514
    %v516 = vmul.f32 %v267, %v514
    %v517 = vadd.f32 %v512, %v515
    %v518 = vadd.f32 %v513, %v516
    %v519 = vstv %s154
    %v520 = vmul.f32 %v279, %v519
    %v521 = vmul.f32 %v280, %v519
    %v522 = vadd.f32 %v517, %v520
    %v523 = vadd.f32 %v518, %v521
    %v524 = vstv %s159
    %v525 = vmul.f32 %v292, %v524
    %v526 = vmul.f32 %v293, %v524
    %v527 = vadd.f32 %v522, %v525
    %v528 = vadd.f32 %v523, %v526
    %v529 = vstv %s164
    %v530 = vadd.f32 %v527, %v529
    %v531 = vadd.f32 %v528, %v529
    %v532 = vmax.f32 %v530, 0.0
    %v533 = vmax.f32 %v531, 0.0
    %v534 = vstv %s165
    %v535 = vmul.f32 %v340, %v534
    %v536 = vmul.f32 %v341, %v534
    %v537 = vstv %s166
    %v538 = vmul.f32 %v388, %v537
    %v539 = vmul.f32 %v389, %v537
    %v540 = vadd.f32 %v535, %v538
    %v541 = vadd.f32 %v536, %v539
    %v542 = vstv %s167
    %v543 = vmul.f32 %v436, %v542
    %v544 = vmul.f32 %v437, %v542
    %v545 = vadd.f32 %v540, %v543
    %v546 = vadd.f32 %v541, %v544
    %v547 = vstv %s168
    %v548 = vmul.f32 %v484, %v547
    %v549 = vmul.f32 %v485, %v547
    %v550 = vadd.f32 %v545, %v548
    %v551 = vadd.f32 %v546, %v549
    %v552 = vstv %s169
    %v553 = vmul.f32 %v532, %v552
    %v554 = vmul.f32 %v533, %v552
    %v555 = vadd.f32 %v550, %v553
    %v556 = vadd.f32 %v551, %v554
    %v557 = vstv %s170
    %v558 = vadd.f32 %v555, %v557
    %v559 = vadd.f32 %v556, %v557
    %560 = vst [vmem:[%s7] sm:$0xff] %v558
    %561 = vst [vmem:[%s7 + $0x8] sm:$0xff] %v559
    // Predicated region
    $region50: #{mlp_forward.1} parent=1 // pred_check
      _
    $region51: #{mlp_forward.1} parent=1 // pred_check_branch
      %563 = sbr.rel (0) target = $region53
    $region52: #{mlp_forward.1} parent=1 // pred_region
      _
    $region53: #{mlp_forward.1} parent=1 // pred_fallthru
      _
    // Predicated region
    $region54: #{mlp_forward.1} parent=1 // pred_check
      _
    $region55: #{mlp_forward.1} parent=1 // pred_check_branch
      %565 = sbr.rel (0) target = $region57
    $region56: #{mlp_forward.1} parent=1 // pred_region
      _
    $region57: #{mlp_forward.1} parent=1 // pred_fallthru
      _
    %566 = vsyncpa [#allocation4], 1
    %567 = vsyncpa [#allocation6], 1
    %568 = vsyncpa [#allocation9], 1

</llo_original>
